<compile_context>
chip_gen: v7x
topology: tpu7x:2x2x1
jax: 0.10.0
libtpu: 0.0.40
codegen_flags: <defaults>
</compile_context>

<pallas_src>
import functools

import jax
import jax.numpy as jnp
from jax.experimental import pallas as pl
from jax.experimental.pallas import tpu as pltpu


# ---------------------------------------------------------------------------
# VMEM budgeting (review items: C/dtype-aware tile sizing, bigger tiles on
# v5e/v6e, never request the whole 64 MiB on v7x).
# ---------------------------------------------------------------------------
@functools.lru_cache(maxsize=None)
def _vmem_budget():
    try:
        cap = int(getattr(pltpu.get_tpu_info(), "vmem_capacity_bytes", 64 << 20))
    except Exception:            # non-TPU / early init: assume the smallest (v7x per-TC)
        cap = 64 << 20
    # Scoped VMEM we ask Mosaic for: 3/4 of physical, capped at 96 MiB.
    #   v5e/v6e (128 MiB): 96 MiB;   v7x (64 MiB/TC): 48 MiB  -> leaves internal
    # scratch / headroom instead of requesting the entire per-TC VMEM.
    vmem_limit = min(3 * cap // 4, 96 << 20)
    # Budget for live double-buffered blocks: half of the scoped limit.
    return vmem_limit // 2, vmem_limit


def _pick_tiles(F, T, c_blk, itemsize, budget_bytes):
    """Pick aligned (freq, frame) tiles sized against the resident C and dtype."""
    # Per grid step, VMEM holds ~2x(input block + output block).  Input bytes
    # ~= 2 * c_blk * f_tile * t_tile * itemsize (interleaved re+im), output
    # ~= f_tile * t_tile * itemsize.
    denom = 2 * (2 * c_blk + 1) * itemsize
    max_plane = max(budget_bytes // denom, 8 * 128)        # f_tile * t_tile elems
    # dtype-aware sublane granularity: 8 (4-byte) / 16 (2-byte) / 32 (1-byte).
    sub = 8 * max(1, 4 // itemsize)
    # Frames (lane axis).
    t_cap = min(2048, max(128, (max_plane // sub) // 128 * 128))
    if T <= t_cap:
        t_tile = T                                         # full extent
    else:
        nt = pl.cdiv(T, t_cap)
        t_tile = 128 * pl.cdiv(pl.cdiv(T, nt), 128)        # multiple of 128
    # Frequency bins (sublane axis).
    f_target = max(sub, (max_plane // max(t_tile, 1)) // sub * sub)
    if F <= f_target:
        f_tile = F                                         # full extent
    else:
        nf = pl.cdiv(F, f_target)
        f_tile = sub * pl.cdiv(pl.cdiv(F, nf), sub)        # multiple of sub
    return f_tile, t_tile


# ---------------------------------------------------------------------------
# Kernels
# ---------------------------------------------------------------------------
def _apply_power(sq, power):
    if power == 2.0:
        return sq                      # |z|^2: no sqrt, no pow
    if power == 1.0:
        return jnp.sqrt(sq)
    # NOTE: padded lanes of ragged edge blocks may produce inf/nan here; they
    # are discarded on store (harmless, per review).
    return sq ** (0.5 * power)         # one pow instead of sqrt + pow


def _make_fused_kernel(power, mono, t_tile, strategy):
    """Kernel over one interleaved block (1, c_blk, f_tile, 2*t_tile)."""
    def kernel(x_ref, out_ref):
        # The block arrives via ONE contiguous DMA; the stride-2 deinterleave
        # happens on-chip (VPU/XLU slots are idle in this mem-bound kernel).
        if strategy == "ref_strided":
            re = x_ref[:, :, :, pl.ds(0, t_tile, 2)]       # even lanes = real
            im = x_ref[:, :, :, pl.ds(1, t_tile, 2)]       # odd lanes  = imag
        else:  # "value_strided"
            x = x_ref[...]
            re = x[..., 0::2]
            im = x[..., 1::2]
        re = re.astype(jnp.float32)    # f32 math (v5e has no bf16 VPU/EUP)
        im = im.astype(jnp.float32)
        mag = _apply_power(re * re + im * im, power)
        if mono:
            mag = jnp.mean(mag, axis=1, keepdims=True)     # channel mean in-block
        out_ref[...] = mag.astype(out_ref.dtype)
    return kernel


def _make_split_kernel(power, mono):
    """Fallback kernel over pre-split re / im blocks (1, c_blk, f_tile, t_tile)."""
    def kernel(re_ref, im_ref, out_ref):
        re = re_ref[...].astype(jnp.float32)
        im = im_ref[...].astype(jnp.float32)
        mag = _apply_power(re * re + im * im, power)
        if mono:
            mag = jnp.mean(mag, axis=1, keepdims=True)
        out_ref[...] = mag.astype(out_ref.dtype)
    return kernel


def _grid_and_specs(B, C, F, T, mono, f_tile, t_tile, lane_mult):
    # mono=True: keep the full channel axis resident (needed for the mean).
    # mono=False: channels go on the grid -> Cx smaller blocks, more parallel
    # grid extent for megacore sharding (works even when B == 1).
    c_blk = C if mono else 1
    grid = (B, C // c_blk, pl.cdiv(F, f_tile), pl.cdiv(T, t_tile))
    in_spec = pl.BlockSpec((1, c_blk, f_tile, lane_mult * t_tile),
                           lambda b, c, fi, ti: (b, c, fi, ti))
    out_spec = pl.BlockSpec((1, 1, f_tile, t_tile),
                            lambda b, c, fi, ti: (b, c, fi, ti))
    return grid, in_spec, out_spec


# ---------------------------------------------------------------------------
# pallas_call wrappers
# ---------------------------------------------------------------------------
@functools.partial(jax.jit,
                   static_argnames=("power", "mono", "strategy", "f_tile", "t_tile"))
def _complex_norm_fused(spec, *, power, mono, strategy, f_tile=None, t_tile=None):
    B, C, F, T, two = spec.shape
    assert two == 2, "last dim must be (real, imag)"
    c_blk = C if mono else 1
    out_c = 1 if mono else C
    budget, vmem_limit = _vmem_budget()
    df, dt = _pick_tiles(F, T, c_blk, jnp.dtype(spec.dtype).itemsize, budget)
    f_tile = df if f_tile is None else f_tile
    t_tile = dt if t_tile is None else t_tile

    # Free reshape (trailing dims are contiguous): ONE interleaved operand, so
    # the HBM stream stays fully contiguous -- no host-side re/im split.
    x = spec.reshape(B, C, F, 2 * T)

    grid, in_spec, out_spec = _grid_and_specs(B, C, F, T, mono, f_tile, t_tile, 2)
    kernel = _make_fused_kernel(float(power), bool(mono), int(t_tile), strategy)
    # TODO(synk): on v7x, sweep pipeline_mode=pl.Buffered(3) on in_spec if xprof
    # shows exposed DMA at grid-step boundaries after these changes.
    return pl.pallas_call(
        kernel,
        out_shape=jax.ShapeDtypeStruct((B, out_c, F, T), spec.dtype),
        grid=grid,
        in_specs=[in_spec],
        out_specs=out_spec,
        compiler_params=pltpu.CompilerParams(
            dimension_semantics=("parallel", "parallel", "parallel", "parallel"),
            vmem_limit_bytes=vmem_limit,
            allow_input_fusion=[True],
        ),
    )(x)


@functools.partial(jax.jit,
                   static_argnames=("power", "mono", "f_tile", "t_tile"))
def _complex_norm_split(spec, *, power, mono, f_tile=None, t_tile=None):
    # Fallback path: host-side re/im split + allow_input_fusion (proven to
    # compile/run everywhere).  Pays either a materialized pre-pass or a
    # stride-2 operand DMA -- used only if the fused path cannot lower.
    B, C, F, T, two = spec.shape
    assert two == 2, "last dim must be (real, imag)"
    c_blk = C if mono else 1
    out_c = 1 if mono else C
    budget, vmem_limit = _vmem_budget()
    df, dt = _pick_tiles(F, T, c_blk, jnp.dtype(spec.dtype).itemsize, budget)
    f_tile = df if f_tile is None else f_tile
    t_tile = dt if t_tile is None else t_tile

    re = spec[..., 0]
    im = spec[..., 1]

    grid, in_spec, out_spec = _grid_and_specs(B, C, F, T, mono, f_tile, t_tile, 1)
    kernel = _make_split_kernel(float(power), bool(mono))
    return pl.pallas_call(
        kernel,
        out_shape=jax.ShapeDtypeStruct((B, out_c, F, T), spec.dtype),
        grid=grid,
        in_specs=[in_spec, in_spec],
        out_specs=out_spec,
        compiler_params=pltpu.CompilerParams(
            dimension_semantics=("parallel", "parallel", "parallel", "parallel"),
            vmem_limit_bytes=vmem_limit,
            allow_input_fusion=[True, True],
        ),
    )(re, im)


# ---------------------------------------------------------------------------
# Strategy probing + public API
# ---------------------------------------------------------------------------
def _reference_block(spec_block, power, mono):
    """Pure-JAX reference (mirrors torch.view_as_complex / abs / pow / mean)."""
    re = spec_block[..., 0].astype(jnp.float32)
    im = spec_block[..., 1].astype(jnp.float32)
    mag = jnp.sqrt(re * re + im * im) ** power
    if mono:
        mag = jnp.mean(mag, axis=1, keepdims=True)
    return mag


_FUSED_STRATEGIES = ("value_strided", "ref_strided")
_fused_unsupported = set()   # (shape, dtype, power, mono, f_tile, t_tile) keys


@functools.lru_cache(maxsize=None)
def _pick_fused_strategy():
    """Probe which on-chip stride-2 deinterleave Mosaic can lower (and that it
    is numerically correct); returns None if only the split fallback works."""
    n = 1 * 2 * 8 * 128 * 2
    probe = jnp.sin(jnp.arange(n, dtype=jnp.float32)).reshape(1, 2, 8, 128, 2)
    want = _reference_block(probe, 1.0, False)
    for strat in _FUSED_STRATEGIES:
        try:
            got = _complex_norm_fused(probe, power=1.0, mono=False, strategy=strat)
            got = jax.block_until_ready(got)
            if got.shape == want.shape and bool(
                    jnp.allclose(got.astype(jnp.float32), want, atol=1e-5, rtol=1e-5)):
                return strat
        except Exception:
            pass
    return None


def complex_norm_block(spec_block, *, power: float = 1.0, mono: bool = False,
                       f_tile=None, t_tile=None):
    """Pallas equivalent of one loop iteration of ComplexNorm.forward.

    spec_block: (B, C, F, T, 2) float array.
    returns:    (B, 1 if mono else C, F, T) array in spec_block's dtype.
    """
    power, mono = float(power), bool(mono)
    strat = _pick_fused_strategy()
    if strat is not None:
        key = (spec_block.shape, str(spec_block.dtype), power, mono, f_tile, t_tile)
        if key not in _fused_unsupported:
            try:
                return _complex_norm_fused(spec_block, power=power, mono=mono,
                                           strategy=strat,
                                           f_tile=f_tile, t_tile=t_tile)
            except Exception:
                # Shape/dtype-specific lowering limit: remember and fall back.
                _fused_unsupported.add(key)
    # TODO(synk): retire this fallback once stride-2 lane slices lower reliably
    # on every generation; it reintroduces the host-side re/im split (extra HBM
    # traffic or short strided DMA descriptors).
    return _complex_norm_split(spec_block, power=power, mono=mono,
                               f_tile=f_tile, t_tile=t_tile)


def complex_norm(spec_list, *, power: float = 1.0, mono: bool = False):
    """Mirror of ComplexNorm.forward: input is a list of (B,C,F,T,2) blocks."""
    return [complex_norm_block(s, power=power, mono=mono) for s in spec_list]


# ---------------------------------------------------------------------------
# Self-test
# ---------------------------------------------------------------------------
if __name__ == "__main__":
    key = jax.random.PRNGKey(0)
    k0, k1, k2, k3 = jax.random.split(key, 4)

    # Two "jagged" spec blocks (different frame counts), shape (B, C, F, T, 2).
    spec0 = jax.random.normal(k0, (2, 4, 16, 16, 2), dtype=jnp.float32)
    spec1 = jax.random.normal(k1, (2, 4, 16, 8, 2), dtype=jnp.float32)
    spec_list = [spec0, spec1]

    ok = True

    def close(a, b, atol=1e-5, rtol=1e-5):
        return a.shape == b.shape and bool(
            jnp.allclose(a.astype(jnp.float32), b, atol=atol, rtol=rtol))

    # Case 1: defaults (power=1.0, mono=False).
    out_default = complex_norm(spec_list, power=1.0, mono=False)
    # Case 2: power=2.0, mono=True (channel-mean + no-sqrt fast path).
    out_mono = complex_norm(spec_list, power=2.0, mono=True)
    for o in out_default + out_mono:
        jax.block_until_ready(o)

    for s, o in zip(spec_list, out_default):
        ok &= close(o, _reference_block(s, 1.0, False))
    for s, o in zip(spec_list, out_mono):
        ok &= close(o, _reference_block(s, 2.0, True))

    # Case 3: general power path (single pow of re^2 + im^2).
    out_p = complex_norm_block(spec0, power=1.5, mono=False)
    ok &= close(out_p, _reference_block(spec0, 1.5, False), atol=1e-5, rtol=1e-4)

    # Case 4: multi-tile grid with a ragged (padded) freq edge block.
    spec2 = jax.random.normal(k2, (2, 2, 20, 16, 2), dtype=jnp.float32)
    out_tiled = complex_norm_block(spec2, power=1.0, mono=False, f_tile=8)
    ok &= close(out_tiled, _reference_block(spec2, 1.0, False))
    out_tiled_m = complex_norm_block(spec2, power=2.0, mono=True, f_tile=8)
    ok &= close(out_tiled_m, _reference_block(spec2, 2.0, True))

    # Case 5: bf16 I/O (bf16 through the DMA, f32 math in-kernel, bf16 out).
    spec_bf16 = jax.random.normal(k3, (2, 2, 16, 16, 2), dtype=jnp.bfloat16)
    out_bf16 = complex_norm_block(spec_bf16, power=1.0, mono=False)
    jax.block_until_ready(out_bf16)
    ok &= (out_bf16.dtype == jnp.bfloat16)
    ok &= close(out_bf16, _reference_block(spec_bf16, 1.0, False),
                atol=5e-2, rtol=5e-2)

    if ok:
        print("KERNEL_OK")
    else:
        raise SystemExit("mismatch vs reference")
</pallas_src>

<mosaic_0001>
module attributes {stable_mosaic.version = 11 : i64} {
  func.func @kernel(%arg0: i32, %arg1: i32, %arg2: i32, %arg3: i32, %arg4: memref<1x1x8x256xf32, #tpu.memory_space<vmem>>, %arg5: memref<1x1x8x128xf32, #tpu.memory_space<vmem>>) attributes {dimension_semantics = [#tpu.dimension_semantics<parallel>, #tpu.dimension_semantics<parallel>, #tpu.dimension_semantics<parallel>, #tpu.dimension_semantics<parallel>], iteration_bounds = array<i64: 1, 2, 1, 1>, scalar_prefetch = 0 : i64, scratch_operands = 0 : i64, tpu.core_type = #tpu.core_type<tc>, window_params = [{transform_indices = @transform_0, window_bounds = array<i64: 1, 1, 8, 256>}, {transform_indices = @transform_1, window_bounds = array<i64: 1, 1, 8, 128>}]} {
    %c0 = arith.constant 0 : index
    %c0_0 = arith.constant 0 : index
    %c0_1 = arith.constant 0 : index
    %c0_2 = arith.constant 0 : index
    %0 = tpu.strided_load %arg4[%c0, %c0_0, %c0_1, %c0_2] {strides = array<i32: 1, 1, 1, 2>} : memref<1x1x8x256xf32, #tpu.memory_space<vmem>>, vector<1x1x8x128xf32>
    %c0_3 = arith.constant 0 : index
    %c0_4 = arith.constant 0 : index
    %c0_5 = arith.constant 0 : index
    %c1 = arith.constant 1 : index
    %1 = tpu.strided_load %arg4[%c0_3, %c0_4, %c0_5, %c1] {strides = array<i32: 1, 1, 1, 2>} : memref<1x1x8x256xf32, #tpu.memory_space<vmem>>, vector<1x1x8x128xf32>
    %2 = arith.mulf %0, %0 : vector<1x1x8x128xf32>
    %3 = arith.mulf %1, %1 : vector<1x1x8x128xf32>
    %4 = arith.addf %2, %3 : vector<1x1x8x128xf32>
    %5 = math.sqrt %4 : vector<1x1x8x128xf32>
    %c0_6 = arith.constant 0 : index
    %c0_7 = arith.constant 0 : index
    %c0_8 = arith.constant 0 : index
    %c0_9 = arith.constant 0 : index
    %6 = vector.load %arg5[%c0_6, %c0_7, %c0_8, %c0_9] : memref<1x1x8x128xf32, #tpu.memory_space<vmem>>, vector<1x1x8x128xf32>
    tpu.vector_store %arg5[%c0_6, %c0_7, %c0_8, %c0_9], %5 {strides = array<i32>} : memref<1x1x8x128xf32, #tpu.memory_space<vmem>>, vector<1x1x8x128xf32>,
    return
  }
  func.func @transform_0(%arg0: i32, %arg1: i32, %arg2: i32, %arg3: i32) -> (i32, i32, i32, i32) {
    %c0_i32 = arith.constant 0 : i32
    return %arg0, %arg1, %arg2, %arg3 : i32, i32, i32, i32
  }
  func.func @transform_1(%arg0: i32, %arg1: i32, %arg2: i32, %arg3: i32) -> (i32, i32, i32, i32) {
    %c0_i32 = arith.constant 0 : i32
    return %arg0, %arg1, %arg2, %arg3 : i32, i32, i32, i32
  }
}

module attributes {stable_mosaic.version = 11 : i64} {
  func.func @kernel(%arg0: i32, %arg1: i32, %arg2: i32, %arg3: i32, %arg4: memref<1x1x16x16xf32, #tpu.memory_space<vmem>>, %arg5: memref<1x1x16x16xf32, #tpu.memory_space<vmem>>, %arg6: memref<1x1x16x16xf32, #tpu.memory_space<vmem>>) attributes {dimension_semantics = [#tpu.dimension_semantics<parallel>, #tpu.dimension_semantics<parallel>, #tpu.dimension_semantics<parallel>, #tpu.dimension_semantics<parallel>], iteration_bounds = array<i64: 2, 4, 1, 1>, scalar_prefetch = 0 : i64, scratch_operands = 0 : i64, tpu.core_type = #tpu.core_type<tc>, window_params = [{transform_indices = @transform_0, window_bounds = array<i64: 1, 1, 16, 16>}, {transform_indices = @transform_1, window_bounds = array<i64: 1, 1, 16, 16>}, {transform_indices = @transform_2, window_bounds = array<i64: 1, 1, 16, 16>}]} {
    %c0 = arith.constant 0 : index
    %c0_0 = arith.constant 0 : index
    %c0_1 = arith.constant 0 : index
    %c0_2 = arith.constant 0 : index
    %0 = vector.load %arg4[%c0, %c0_0, %c0_1, %c0_2] : memref<1x1x16x16xf32, #tpu.memory_space<vmem>>, vector<1x1x16x16xf32>
    %c0_3 = arith.constant 0 : index
    %c0_4 = arith.constant 0 : index
    %c0_5 = arith.constant 0 : index
    %c0_6 = arith.constant 0 : index
    %1 = vector.load %arg5[%c0_3, %c0_4, %c0_5, %c0_6] : memref<1x1x16x16xf32, #tpu.memory_space<vmem>>, vector<1x1x16x16xf32>
    %2 = arith.mulf %0, %0 : vector<1x1x16x16xf32>
    %3 = arith.mulf %1, %1 : vector<1x1x16x16xf32>
    %4 = arith.addf %2, %3 : vector<1x1x16x16xf32>
    %5 = math.sqrt %4 : vector<1x1x16x16xf32>
    %c0_7 = arith.constant 0 : index
    %c0_8 = arith.constant 0 : index
    %c0_9 = arith.constant 0 : index
    %c0_10 = arith.constant 0 : index
    %6 = vector.load %arg6[%c0_7, %c0_8, %c0_9, %c0_10] : memref<1x1x16x16xf32, #tpu.memory_space<vmem>>, vector<1x1x16x16xf32>
    tpu.vector_store %arg6[%c0_7, %c0_8, %c0_9, %c0_10], %5 {strides = array<i32>} : memref<1x1x16x16xf32, #tpu.memory_space<vmem>>, vector<1x1x16x16xf32>,
    return
  }
  func.func @transform_0(%arg0: i32, %arg1: i32, %arg2: i32, %arg3: i32) -> (i32, i32, i32, i32) {
    %c0_i32 = arith.constant 0 : i32
    return %arg0, %arg1, %arg2, %arg3 : i32, i32, i32, i32
  }
  func.func @transform_1(%arg0: i32, %arg1: i32, %arg2: i32, %arg3: i32) -> (i32, i32, i32, i32) {
    %c0_i32 = arith.constant 0 : i32
    return %arg0, %arg1, %arg2, %arg3 : i32, i32, i32, i32
  }
  func.func @transform_2(%arg0: i32, %arg1: i32, %arg2: i32, %arg3: i32) -> (i32, i32, i32, i32) {
    %c0_i32 = arith.constant 0 : i32
    return %arg0, %arg1, %arg2, %arg3 : i32, i32, i32, i32
  }
}

</mosaic_0001>

<llo_original>
// kernel: _complex_norm_split.1
$region0: #{_complex_norm_split.1}
  #allocation0 [shape = 'u32[]', space=smem, size = 0x4, offset = 0x4, fixed_abs, tag = 'smem constant byte address 0x4 - core index']
  #allocation1 [shape = 'u32[144,128]{1,0:T(1,128)}', space=vmem, size = 0x12000, scoped, tag = 'internal scratch']
  %s0 = inlined_call_operand.vmem [shape: f32[2,4,16,16], index: 0, kind: input, shape index: {}]
  %s1 = inlined_call_operand.vmem [shape: f32[2,4,16,16], index: 1, kind: input, shape index: {}]
  %s2 = inlined_call_operand.hbm [shape: f32[2,4,16,16], index: 2, kind: output, shape index: {}]
  %s3 = sld [smem:[#allocation0]]
  $region41: #{_complex_norm_split.1} parent=0
    _
  %s5 = ssub.s32 1, %s3
  %s6 = scalar_select 0, %s5, %s3
  $region1: #{_complex_norm_split.1} parent=0
    #allocation2 [shape = 'u8[16384]{0}', space=vmem, size = 0x4000, scoped, tag = 'output window, operand 0']
    #allocation3 [shape = 's32[2]{0}', space=sflag, size = 0x8, scoped, tag = 'scoped memory for _complex_norm_split.1']
    %7 = vsyncpa [#allocation3], 0
    %s8 = scalar_lea.sflag [#allocation3], 1
    %9 = vsyncpa %s8, 0
    loop: start=0, step=1, limit=10
    $region2: #{_complex_norm_split.1} parent=1 // loop_pre_header
      _
    $region3: #{_complex_norm_split.1} parent=1 // loop_header
      %s11 = sphi 0, %s15
      %p12 = scmp.ge.s32.totalorder %s11, 10
      %s18 = sphi 0, %s44
      %s19 = sphi 0, %s40
      %s20 = sphi 0, %s36
      %s21 = sphi 0, %s32
      %s22 = sphi 0, %s18
      %s23 = sphi 0, %s19
      %s24 = sphi 0, %s20
      %s25 = sphi 0, %s21
      %s26 = sphi 0, %s22
      %s27 = sphi 0, %s23
      %s28 = sphi 0, %s24
      %s29 = sphi 0, %s25
      %s53 = sphi 0, %s55
      %s56 = sphi 0, %s53
      %s57 = sphi 0, %s56
      %s73 = sphi 0, %s57
      %s85 = sphi 0, %s87
      %s88 = sphi 0, %s85
      %s89 = sphi 0, %s88
      %s105 = sphi 0, %s89
      %s117 = sphi 0, %s119
      %s120 = sphi 0, %s117
      %s121 = sphi 0, %s120
      %s137 = sphi 0, %s121
    $region4: #{_complex_norm_split.1} parent=1 // loop_header_branch
      %14 = sbr.rel (%p12) target = $region8
    $region5: #{_complex_norm_split.1} parent=1 // loop_body
      %s16 = ssub.s32 %s11, 1
      %s17 = ssub.s32 %s11, 2
      %s30 = sadd.s32 1, %s21
      %p31 = scmp.ge.s32.totalorder %s30, 1
      %s32 = scalar_select %p31, 0, %s30
      %s33 = sadd.s32 1, %s20
      %s34 = scalar_select %p31, %s33, %s20
      %p35 = scmp.ge.s32.totalorder %s34, 1
      %s36 = scalar_select %p35, 0, %s34
      %s37 = sadd.s32 1, %s19
      %s38 = scalar_select %p35, %s37, %s19
      %p39 = scmp.ge.s32.totalorder %s38, 4
      %s40 = scalar_select %p39, 0, %s38
      %s41 = sadd.s32 1, %s18
      %s42 = scalar_select %p39, %s41, %s18
      %p43 = scmp.ge.s32.totalorder %s42, 2
      %s44 = scalar_select %p43, 0, %s42
      %s45 = ssub.s32 %s18, %s44
      %s46 = ssub.s32 %s19, %s40
      %s47 = sor.u32 %s45, %s46
      %s48 = ssub.s32 %s20, %s36
      %s49 = sor.u32 %s47, %s48
      %s50 = ssub.s32 %s21, %s32
      %s51 = sor.u32 %s49, %s50
      %p52 = scmp.eq.s32.totalorder %s51, 0
      %s54 = sadd.s32 %s53, 1
      %s55 = scalar_select %p52, %s53, %s54
      %p58 = pneg %p52
      %p59 = scmp.eq.s32.totalorder %s11, 7
      %p60 = por %p58, %p59
      %p61 = scmp.ne.s32.totalorder %s53, %s56
      %p62 = scmp.eq.s32.totalorder %s11, 0
      %p63 = por %p61, %p62
      %p64 = scmp.ne.s32.totalorder %s53, %s56
      %p65 = scmp.eq.s32.totalorder %s16, 7
      %p66 = por %p64, %p65
      %p67 = scmp.ne.s32.totalorder %s56, %s57
      %p68 = scmp.eq.s32.totalorder %s16, 0
      %p69 = por %p67, %p68
      %p70 = scmp.ne.s32.totalorder %s56, %s57
      %p71 = scmp.eq.s32.totalorder %s17, 7
      %p72 = por %p70, %p71
      %p74 = scmp.ne.s32.totalorder %s57, %s73
      %p75 = scmp.eq.s32.totalorder %s17, 0
      %p76 = por %p74, %p75
      %s77 = ssub.s32 %s18, %s44
      %s78 = ssub.s32 %s19, %s40
      %s79 = sor.u32 %s77, %s78
      %s80 = ssub.s32 %s20, %s36
      %s81 = sor.u32 %s79, %s80
      %s82 = ssub.s32 %s21, %s32
      %s83 = sor.u32 %s81, %s82
      %p84 = scmp.eq.s32.totalorder %s83, 0
      %s86 = sadd.s32 %s85, 1
      %s87 = scalar_select %p84, %s85, %s86
      %p90 = pneg %p84
      %p91 = scmp.eq.s32.totalorder %s11, 7
      %p92 = por %p90, %p91
      %p93 = scmp.ne.s32.totalorder %s85, %s88
      %p94 = scmp.eq.s32.totalorder %s11, 0
      %p95 = por %p93, %p94
      %p96 = scmp.ne.s32.totalorder %s85, %s88
      %p97 = scmp.eq.s32.totalorder %s16, 7
      %p98 = por %p96, %p97
      %p99 = scmp.ne.s32.totalorder %s88, %s89
      %p100 = scmp.eq.s32.totalorder %s16, 0
      %p101 = por %p99, %p100
      %p102 = scmp.ne.s32.totalorder %s88, %s89
      %p103 = scmp.eq.s32.totalorder %s17, 7
      %p104 = por %p102, %p103
      %p106 = scmp.ne.s32.totalorder %s89, %s105
      %p107 = scmp.eq.s32.totalorder %s17, 0
      %p108 = por %p106, %p107
      %s109 = ssub.s32 %s18, %s44
      %s110 = ssub.s32 %s19, %s40
      %s111 = sor.u32 %s109, %s110
      %s112 = ssub.s32 %s20, %s36
      %s113 = sor.u32 %s111, %s112
      %s114 = ssub.s32 %s21, %s32
      %s115 = sor.u32 %s113, %s114
      %p116 = scmp.eq.s32.totalorder %s115, 0
      %s118 = sadd.s32 %s117, 1
      %s119 = scalar_select %p116, %s117, %s118
      %p122 = pneg %p116
      %p123 = scmp.eq.s32.totalorder %s11, 7
      %p124 = por %p122, %p123
      %p125 = scmp.ne.s32.totalorder %s117, %s120
      %p126 = scmp.eq.s32.totalorder %s11, 0
      %p127 = por %p125, %p126
      %p128 = scmp.ne.s32.totalorder %s117, %s120
      %p129 = scmp.eq.s32.totalorder %s16, 7
      %p130 = por %p128, %p129
      %p131 = scmp.ne.s32.totalorder %s120, %s121
      %p132 = scmp.eq.s32.totalorder %s16, 0
      %p133 = por %p131, %p132
      %p134 = scmp.ne.s32.totalorder %s120, %s121
      %p135 = scmp.eq.s32.totalorder %s17, 7
      %p136 = por %p134, %p135
      %p138 = scmp.ne.s32.totalorder %s121, %s137
      %p139 = scmp.eq.s32.totalorder %s17, 0
      %p140 = por %p138, %p139
      %p141 = scmp.le.s32.totalorder 1, %s11
      %p142 = scmp.lt.s32.totalorder %s11, 9
      %p143 = pnand %p141, %p142
      %p144 = pneg %p143
      // Predicated region
      $region9: #{_complex_norm_split.1} parent=5 // pred_check
        _
      $region10: #{_complex_norm_split.1} parent=5 // pred_check_branch
        %146 = sbr.rel (%p143) target = $region12
      $region11: #{_complex_norm_split.1} parent=5 // pred_region
        %s147 = ssub.s32 %s11, 1
      $region12: #{_complex_norm_split.1} parent=5 // pred_fallthru
        _
      %p148 = scmp.lt.s32.totalorder %s11, 8
      // Predicated region
      $region13: #{_complex_norm_split.1} parent=5 // pred_check
        %p149 = pneg %p148
      $region14: #{_complex_norm_split.1} parent=5 // pred_check_branch
        %151 = sbr.rel (%p149) target = $region16
      $region15: #{_complex_norm_split.1} parent=5 // pred_region
        // Predicated region
        $region17: #{_complex_norm_split.1} parent=15 // pred_check
          %p152 = pneg %p63
        $region18: #{_complex_norm_split.1} parent=15 // pred_check_branch
          %154 = sbr.rel (%p152) target = $region20
        $region19: #{_complex_norm_split.1} parent=15 // pred_region
          %s155 = smul.u32 2, %s20
          %p156 = scmp.lt.s32.totalorder %s18, 1
          %s157 = scalar_select %p156, %s18, 1
          %p158 = scmp.lt.s32.totalorder %s19, 3
          %s159 = scalar_select %p158, %s19, 3
          %p160 = scmp.lt.s32.totalorder %s155, 1
          %s161 = scalar_select %p160, %s155, 1
          %p162 = scmp.lt.s32.totalorder %s21, 0
          %s163 = scalar_select %p162, %s21, 0
          %s164 = sadd.s32 %s163, %s161
          %s165 = smul.addr %s159, 2
          %s166 = sadd.s32 %s164, %s165
          %s167 = smul.addr %s157, 8
          %s168 = sadd.s32 %s166, %s167
          %s169 = smul.addr %s168, 8
          %s170 = scalar_lea.vmem %s0, %s169
          %s171 = smul.u32 2, %s20
        $region20: #{_complex_norm_split.1} parent=15 // pred_fallthru
          _
        // Predicated region
        $region21: #{_complex_norm_split.1} parent=15 // pred_check
          %p172 = pneg %p95
        $region22: #{_complex_norm_split.1} parent=15 // pred_check_branch
          %174 = sbr.rel (%p172) target = $region24
        $region23: #{_complex_norm_split.1} parent=15 // pred_region
          %s175 = smul.u32 2, %s20
          %p176 = scmp.lt.s32.totalorder %s18, 1
          %s177 = scalar_select %p176, %s18, 1
          %p178 = scmp.lt.s32.totalorder %s19, 3
          %s179 = scalar_select %p178, %s19, 3
          %p180 = scmp.lt.s32.totalorder %s175, 1
          %s181 = scalar_select %p180, %s175, 1
          %p182 = scmp.lt.s32.totalorder %s21, 0
          %s183 = scalar_select %p182, %s21, 0
          %s184 = sadd.s32 %s183, %s181
          %s185 = smul.addr %s179, 2
          %s186 = sadd.s32 %s184, %s185
          %s187 = smul.addr %s177, 8
          %s188 = sadd.s32 %s186, %s187
          %s189 = smul.addr %s188, 8
          %s190 = scalar_lea.vmem %s1, %s189
          %s191 = smul.u32 2, %s20
        $region24: #{_complex_norm_split.1} parent=15 // pred_fallthru
          _
      $region16: #{_complex_norm_split.1} parent=5 // pred_fallthru
        _
      %p192 = scmp.le.s32.totalorder 1, %s11
      %p193 = scmp.lt.s32.totalorder %s11, 9
      %p194 = pnand %p192, %p193
      %p195 = pneg %p194
      // Predicated region
      $region25: #{_complex_norm_split.1} parent=5 // pred_check
        _
      $region26: #{_complex_norm_split.1} parent=5 // pred_check_branch
        %197 = sbr.rel (%p194) target = $region28
      $region27: #{_complex_norm_split.1} parent=5 // pred_region
        %s198 = ssub.s32 %s11, 1
        %s199 = smul.u32 2, %s24
        %p200 = scmp.lt.s32.totalorder %s22, 1
        %s201 = scalar_select %p200, %s22, 1
        %p202 = scmp.lt.s32.totalorder %s23, 3
        %s203 = scalar_select %p202, %s23, 3
        %p204 = scmp.lt.s32.totalorder %s199, 1
        %s205 = scalar_select %p204, %s199, 1
        %p206 = scmp.lt.s32.totalorder %s25, 0
        %s207 = scalar_select %p206, %s25, 0
        %s208 = sadd.s32 %s207, %s205
        %s209 = smul.addr %s203, 2
        %s210 = sadd.s32 %s208, %s209
        %s211 = smul.addr %s201, 8
        %s212 = sadd.s32 %s210, %s211
        %s213 = smul.addr %s212, 8
        %s214 = scalar_lea.vmem %s0, %s213
        %p215 = pneg %p69
        %p216 = pneg %p66
        %s217 = smul.u32 2, %s24
        %p218 = scmp.lt.s32.totalorder %s22, 1
        %s219 = scalar_select %p218, %s22, 1
        %p220 = scmp.lt.s32.totalorder %s23, 3
        %s221 = scalar_select %p220, %s23, 3
        %p222 = scmp.lt.s32.totalorder %s217, 1
        %s223 = scalar_select %p222, %s217, 1
        %p224 = scmp.lt.s32.totalorder %s25, 0
        %s225 = scalar_select %p224, %s25, 0
        %s226 = sadd.s32 %s225, %s223
        %s227 = smul.addr %s221, 2
        %s228 = sadd.s32 %s226, %s227
        %s229 = smul.addr %s219, 8
        %s230 = sadd.s32 %s228, %s229
        %s231 = smul.addr %s230, 8
        %s232 = scalar_lea.vmem %s1, %s231
        %p233 = pneg %p101
        %p234 = pneg %p98
        %p235 = pneg %p133
        %p236 = pneg %p130
        %s237 = sand.u32 %s120, 1
        %s238 = scalar_lea.sflag [#allocation3], %s237
        %s239 = sand.u32 %s120, 1
        %s240 = smul.addr %s239, 16
        %s241 = scalar_lea.vmem [#allocation2], %s240
        %s242 = smul.u32 2, %s24
        %p243 = scmp.lt.s32.totalorder %s22, 1
        %s244 = scalar_select %p243, %s22, 1
        %p245 = scmp.lt.s32.totalorder %s23, 3
        %s246 = scalar_select %p245, %s23, 3
        %p247 = scmp.lt.s32.totalorder %s242, 1
        %s248 = scalar_select %p247, %s242, 1
        %p249 = scmp.lt.s32.totalorder %s25, 0
        %s250 = scalar_select %p249, %s25, 0
        %s251 = sadd.s32 %s250, %s248
        %s252 = smul.addr %s246, 2
        %s253 = sadd.s32 %s251, %s252
        %s254 = smul.addr %s244, 8
        %s255 = sadd.s32 %s253, %s254
        %s256 = smul.addr %s255, 8
        %s257 = scalar_lea.vmem %s0, %s256
        %s258 = smul.u32 2, %s24
        %s259 = smul.u32 2, %s24
        %p260 = scmp.lt.s32.totalorder %s22, 1
        %s261 = scalar_select %p260, %s22, 1
        %p262 = scmp.lt.s32.totalorder %s23, 3
        %s263 = scalar_select %p262, %s23, 3
        %p264 = scmp.lt.s32.totalorder %s259, 1
        %s265 = scalar_select %p264, %s259, 1
        %p266 = scmp.lt.s32.totalorder %s25, 0
        %s267 = scalar_select %p266, %s25, 0
        %s268 = sadd.s32 %s267, %s265
        %s269 = smul.addr %s263, 2
        %s270 = sadd.s32 %s268, %s269
        %s271 = smul.addr %s261, 8
        %s272 = sadd.s32 %s270, %s271
        %s273 = smul.addr %s272, 8
        %s274 = scalar_lea.vmem %s1, %s273
        %s275 = smul.u32 2, %s24
        %s276 = smul.u32 2, %s24
        %v277 = vld [vmem:[%s257] sm:$0xff]
        %v278 = vld [vmem:[%s257 + $0x8] sm:$0xff]
        %v279 = vld [vmem:[%s274] sm:$0xff]
        %v280 = vld [vmem:[%s274 + $0x8] sm:$0xff]
        %v281 = vmul.f32 %v277, %v277
        %v282 = vmul.f32 %v278, %v278
        %v283 = vmul.f32 %v279, %v279
        %v284 = vmul.f32 %v280, %v280
        %v285 = vadd.f32 %v281, %v283
        %v286 = vadd.f32 %v282, %v284
        %v287 = vrsqrt.pop %v285
        %v288 = vmul.f32 %v285, %v287
        %vm289 = vcmp.eq.f32.partialorder %v285, inf
        %v290 = vsel %vm289, %v285, %v288
        %vm291 = vcmp.eq.f32.partialorder %v285, 0.0
        %v292 = vand.u32 %v285, 2147483648
        %v293 = vsel %vm291, %v292, %v290
        %v294 = vrsqrt.pop %v286
        %v295 = vmul.f32 %v286, %v294
        %vm296 = vcmp.eq.f32.partialorder %v286, inf
        %v297 = vsel %vm296, %v286, %v295
        %vm298 = vcmp.eq.f32.partialorder %v286, 0.0
        %v299 = vand.u32 %v286, 2147483648
        %v300 = vsel %vm298, %v299, %v297
        %vm301 = vcmask 130048
        %302 = vst.msk [vmem:[%s241] sm:$0xff] %vm301, %v293
        %303 = vst.msk [vmem:[%s241 + $0x8] sm:$0xff] %vm301, %v300
        %s304 = sand.u32 %s120, 1
        %s305 = scalar_lea.sflag [#allocation3], %s304
        %s306 = sand.u32 %s120, 1
        %s307 = smul.addr %s306, 16
        %s308 = scalar_lea.vmem [#allocation2], %s307
        // Predicated region
        $region29: #{_complex_norm_split.1} parent=27 // pred_check
          %p309 = pneg %p130
        $region30: #{_complex_norm_split.1} parent=27 // pred_check_branch
          %311 = sbr.rel (%p309) target = $region32
        $region31: #{_complex_norm_split.1} parent=27 // pred_region
          %s312 = smul.u32 2, %s24
          %s314 = ssub.s32 256, 256
          %315 = vsyncadd %s305, %s314
          %s316 = sadd.s32 %s25, %s312
          %s317 = smul.addr %s23, 2
          %s318 = sadd.s32 %s316, %s317
          %s319 = smul.addr %s22, 8
          %s320 = sadd.s32 %s318, %s319
          %s321 = smul.addr %s320, 128
          %s322 = scalar_lea.hbm %s2, %s321
          %s323 = sshll.u32 %s308, 4
          %s324 = int_to_ptr.vmem [resolvable:$true] %s323
          %329 = dma.vmem_to_hbm [thread:$0]  %s324, 256, %s322, %s305, 128, 128, 8
        $region32: #{_complex_norm_split.1} parent=27 // pred_fallthru
          _
      $region28: #{_complex_norm_split.1} parent=5 // pred_fallthru
        _
      %p330 = scmp.le.s32.totalorder 2, %s11
      // Predicated region
      $region33: #{_complex_norm_split.1} parent=5 // pred_check
        %p331 = pneg %p330
      $region34: #{_complex_norm_split.1} parent=5 // pred_check_branch
        %333 = sbr.rel (%p331) target = $region36
      $region35: #{_complex_norm_split.1} parent=5 // pred_region
        %s334 = ssub.s32 %s11, 2
        // Predicated region
        $region37: #{_complex_norm_split.1} parent=35 // pred_check
          %p335 = pneg %p136
        $region38: #{_complex_norm_split.1} parent=35 // pred_check_branch
          %337 = sbr.rel (%p335) target = $region40
        $region39: #{_complex_norm_split.1} parent=35 // pred_region
          %s338 = sand.u32 %s121, 1
          %s339 = scalar_lea.sflag [#allocation3], %s338
          %s340 = sand.u32 %s121, 1
          %s341 = smul.addr %s340, 16
          %s342 = scalar_lea.vmem [#allocation2], %s341
          %343 = dma.done %s339, 256
        $region40: #{_complex_norm_split.1} parent=35 // pred_fallthru
          _
      $region36: #{_complex_norm_split.1} parent=5 // pred_fallthru
        _
    $region6: #{_complex_norm_split.1} parent=1 // loop_footer
      %s15 = sadd.s32 1, %s11
    $region7: #{_complex_norm_split.1} parent=1 // loop_footer_branch
      %10 = sbr.rel target = $region3
    $region8: #{_complex_norm_split.1} parent=1 // loop_exit
      _
    %344 = vsyncpa [#allocation3], 1
    %s345 = scalar_lea.sflag [#allocation3], 1
    %346 = vsyncpa %s345, 1

</llo_original>
